<compile_context>
chip_gen: v7x
topology: tpu7x:2x2x1
jax: 0.10.0
libtpu: 0.0.40
codegen_flags: <defaults>
</compile_context>

<pallas_src>
import functools

import jax
import jax.numpy as jnp
from jax import lax
from jax.experimental import pallas as pl
from jax.experimental.pallas import tpu as pltpu

BN_EPS = 1e-5


def _round_up(a, b):
    return (a + b - 1) // b * b


def _bn_relu_store(z, gb_ref, o_ref, n_real):
    """Training-mode BN (folded to scale/shift) + ReLU on a (Np, tile_fout) f32 block."""
    inv_n = 1.0 / n_real
    s1 = jnp.sum(z, axis=0, keepdims=True)
    s2 = jnp.sum(z * z, axis=0, keepdims=True)
    mean = s1 * inv_n
    # Biased batch variance; clamp against f32 cancellation going slightly negative.
    var = jnp.maximum(s2 * inv_n - mean * mean, 0.0)
    inv_std = lax.rsqrt(var + BN_EPS)

    gamma = gb_ref[0:1, :]
    beta = gb_ref[1:2, :]
    scale = gamma * inv_std          # (1, tile_fout)
    shift = beta - mean * scale      # (1, tile_fout)

    o_ref[...] = jnp.maximum(z * scale + shift, 0.0).astype(o_ref.dtype)


def dense_bn_kernel_single_k(x_ref, w_ref, gb_ref, o_ref, *, n_real):
    # x_ref: (Np, FinP), w_ref: (FinP, tile_fout), gb_ref: (2, tile_fout)
    z = jnp.dot(x_ref[...], w_ref[...], preferred_element_type=jnp.float32)
    _bn_relu_store(z, gb_ref, o_ref, n_real)


def dense_bn_kernel_multi_k(x_ref, w_ref, gb_ref, o_ref, acc_ref, *, n_real):
    # Grid = (fout_tiles, k_tiles); k is the last ("arbitrary") axis.
    k = pl.program_id(1)

    @pl.when(k == 0)
    def _():
        acc_ref[...] = jnp.zeros_like(acc_ref)

    acc_ref[...] += jnp.dot(x_ref[...], w_ref[...],
                            preferred_element_type=jnp.float32)

    @pl.when(k == pl.num_programs(1) - 1)
    def _():
        _bn_relu_store(acc_ref[...], gb_ref, o_ref, n_real)


def dense_bn(x, weight, bias, gamma, beta, *, block_fout=256, block_fin=512,
             use_bf16_mxu=False, out_dtype=None):
    """Fused Linear -> BatchNorm1d(train) -> ReLU.

    x:      (N, Fin)
    weight: (Fout, Fin)   PyTorch nn.Linear layout (transposed once, in HBM).
    bias:   (Fout,)       no-op under training-mode BatchNorm; never sent to TPU.
    gamma:  (Fout,)       BatchNorm weight
    beta:   (Fout,)       BatchNorm bias
    """
    del bias  # cancels exactly in (z - mean) under training-mode (batch-stat) BN.

    n, fin = x.shape
    fout = weight.shape[0]
    out_dtype = x.dtype if out_dtype is None else out_dtype

    # ---- padded / tiled shapes (lane = 128, sublane = 8) ----
    n_p = _round_up(n, 8)
    fin_p = _round_up(fin, 128)

    fout_128 = _round_up(fout, 128)
    block_fout = min(_round_up(block_fout, 128), fout_128)
    # Try to give the Fout ("parallel") axis >= 2 tiles so both v7x TCs /
    # megacore get work (only possible when the padded Fout allows 128-wide tiles).
    if fout_128 // block_fout < 2 and fout_128 >= 256:
        block_fout = _round_up(fout_128 // 2, 128)
    fout_p = _round_up(fout_128, block_fout)
    j_tiles = fout_p // block_fout

    block_fin = min(_round_up(block_fin, 128), fin_p)
    fin_p = _round_up(fin_p, block_fin)
    k_tiles = fin_p // block_fin

    in_dtype = jnp.bfloat16 if use_bf16_mxu else x.dtype
    in_bytes = jnp.dtype(in_dtype).itemsize
    out_bytes = jnp.dtype(out_dtype).itemsize

    # ---- host-side prep (cast once, pad only if needed, transpose W once) ----
    x_in = x.astype(in_dtype)
    if (n_p, fin_p) != (n, fin):
        # Zero padding is exact: padded Fin columns meet zero W rows; padded
        # batch rows contribute 0 to sum(z)/sum(z*z) (we divide by the real N).
        x_in = jnp.pad(x_in, ((0, n_p - n), (0, fin_p - fin)))

    w_in = jnp.pad(weight.T.astype(in_dtype),
                   ((0, fin_p - fin), (0, fout_p - fout)))

    # gamma/beta merged: row 0 = gamma, row 1 = beta.  Padded Fout columns have
    # gamma=beta=0 -> normalize to 0 and are sliced off.
    gb = jnp.pad(jnp.stack([gamma, beta]).astype(jnp.float32),
                 ((0, 0), (0, fout_p - fout)))

    # ---- BlockSpecs ----
    # x block index never changes when k_tiles == 1 -> single-buffer the
    # biggest operand instead of wasting a second pipeline buffer.
    x_pipeline = pl.Buffered(1) if k_tiles == 1 else None
    x_spec = pl.BlockSpec((n_p, block_fin), lambda j, k: (0, k),
                          pipeline_mode=x_pipeline)
    w_spec = pl.BlockSpec((block_fin, block_fout), lambda j, k: (k, j))
    gb_spec = pl.BlockSpec((2, block_fout), lambda j, k: (0, j))
    out_spec = pl.BlockSpec((n_p, block_fout), lambda j, k: (0, j))

    if k_tiles == 1:
        kernel = functools.partial(dense_bn_kernel_single_k, n_real=n)
        scratch_shapes = []
        acc_bytes = 0
    else:
        kernel = functools.partial(dense_bn_kernel_multi_k, n_real=n)
        scratch_shapes = [pltpu.VMEM((n_p, block_fout), jnp.float32)]
        acc_bytes = n_p * block_fout * 4

    x_buffers = 1 if k_tiles == 1 else 2
    vmem_bytes = (
        x_buffers * n_p * block_fin * in_bytes          # x
        + 2 * block_fin * block_fout * in_bytes         # W (double-buffered)
        + 2 * 2 * block_fout * 4                        # gamma/beta
        + 2 * n_p * block_fout * out_bytes              # output tile
        + acc_bytes)                                    # f32 accumulator
    # Raise the scoped-VMEM limit to fit the actual footprint (+headroom);
    # never below 32 MiB, never above the 128 MiB physical ceiling.
    vmem_limit = min(max(int(vmem_bytes * 1.4) + (2 << 20), 32 << 20), 128 << 20)

    cost = pl.CostEstimate(
        flops=2 * n * fin * fout,
        transcendentals=0,
        bytes_accessed=(n * fin * in_bytes + fin * fout * in_bytes
                        + 2 * fout * 4 + n * fout * out_bytes),
    )

    out_p = pl.pallas_call(
        kernel,
        out_shape=jax.ShapeDtypeStruct((n_p, fout_p), out_dtype),
        grid_spec=pltpu.PrefetchScalarGridSpec(
            num_scalar_prefetch=0,
            grid=(j_tiles, k_tiles),
            in_specs=[x_spec, w_spec, gb_spec],
            out_specs=out_spec,
            scratch_shapes=scratch_shapes,
        ),
        compiler_params=pltpu.CompilerParams(
            dimension_semantics=("parallel", "arbitrary"),
            vmem_limit_bytes=vmem_limit,
        ),
        cost_estimate=cost,
    )(x_in, w_in, gb)

    return out_p[:n, :fout]


def _reference(x, weight, bias, gamma, beta):
    z = x @ weight.T + bias
    mean = z.mean(axis=0, keepdims=True)
    var = ((z - mean) ** 2).mean(axis=0, keepdims=True)
    return jnp.maximum(gamma * (z - mean) / jnp.sqrt(var + BN_EPS) + beta, 0.0)


def _make_params(key, fin, fout):
    kw, kb = jax.random.split(key)
    bound = 1.0 / (fin ** 0.5)
    weight = jax.random.uniform(kw, (fout, fin), minval=-bound, maxval=bound,
                                dtype=jnp.float32)
    bias = jax.random.uniform(kb, (fout,), minval=-bound, maxval=bound,
                              dtype=jnp.float32)
    gamma = jnp.ones((fout,), dtype=jnp.float32)
    beta = jnp.zeros((fout,), dtype=jnp.float32)
    return weight, bias, gamma, beta


if __name__ == "__main__":
    key = jax.random.PRNGKey(0)
    k1, k2, k3, k4 = jax.random.split(key, 4)

    # Case 1: Dense_bn(in_features=32, out_features=64) -- single-K fast path.
    N, FIN, FOUT = 8, 32, 64
    x = jax.random.normal(k1, (N, FIN), dtype=jnp.float32)
    weight, bias, gamma, beta = _make_params(k2, FIN, FOUT)
    out = dense_bn(x, weight, bias, gamma, beta)
    jax.block_until_ready(out)
    ref = _reference(x, weight, bias, gamma, beta)
    assert out.shape == (N, FOUT)
    assert jnp.allclose(out, ref, atol=1e-4, rtol=1e-4)

    # Case 2: larger Fin/Fout to exercise the K-reduction axis and >=2 Fout tiles.
    N2, FIN2, FOUT2 = 16, 640, 384
    x2 = jax.random.normal(k3, (N2, FIN2), dtype=jnp.float32)
    weight2, bias2, gamma2, beta2 = _make_params(k4, FIN2, FOUT2)
    out2 = dense_bn(x2, weight2, bias2, gamma2, beta2)
    jax.block_until_ready(out2)
    ref2 = _reference(x2, weight2, bias2, gamma2, beta2)
    assert out2.shape == (N2, FOUT2)
    assert jnp.allclose(out2, ref2, atol=1e-3, rtol=1e-3)

    print("KERNEL_OK")
</pallas_src>

<mosaic_0001>
module attributes {stable_mosaic.version = 11 : i64} {
  func.func @dense_bn_kernel_single_k(%arg0: i32, %arg1: i32, %arg2: memref<8x128xf32, #tpu.memory_space<vmem>>, %arg3: memref<128x128xf32, #tpu.memory_space<vmem>>, %arg4: memref<2x128xf32, #tpu.memory_space<vmem>>, %arg5: memref<8x128xf32, #tpu.memory_space<vmem>>) attributes {dimension_semantics = [#tpu.dimension_semantics<parallel>, #tpu.dimension_semantics<arbitrary>], iteration_bounds = array<i64: 1, 1>, scalar_prefetch = 0 : i64, scratch_operands = 0 : i64, tpu.core_type = #tpu.core_type<tc>, window_params = [{pipeline_mode = #tpu.pipeline_mode<synchronous>, transform_indices = @transform_0, window_bounds = array<i64: 8, 128>}, {transform_indices = @transform_1, window_bounds = array<i64: 128, 128>}, {transform_indices = @transform_2, window_bounds = array<i64: 2, 128>}, {transform_indices = @transform_3, window_bounds = array<i64: 8, 128>}]} {
    %c0 = arith.constant 0 : index
    %c0_0 = arith.constant 0 : index
    %0 = vector.load %arg2[%c0, %c0_0] : memref<8x128xf32, #tpu.memory_space<vmem>>, vector<8x128xf32>
    %c0_1 = arith.constant 0 : index
    %c0_2 = arith.constant 0 : index
    %1 = vector.load %arg3[%c0_1, %c0_2] : memref<128x128xf32, #tpu.memory_space<vmem>>, vector<128x128xf32>
    %cst = arith.constant dense<0.000000e+00> : vector<8x128xf32>
    %2 = tpu.matmul %0, %1, %cst {dimension_numbers = #tpu.dot_dimension_numbers<[1], [0], [0], [1], [0, 0, 1, 1], [], []>} : vector<8x128xf32>, vector<128x128xf32>, vector<8x128xf32> -> vector<8x128xf32>
    %cst_3 = arith.constant dense<0.000000e+00> : vector<128xf32>
    %3 = vector.multi_reduction <add>, %2, %cst_3 [0] : vector<8x128xf32> to vector<128xf32>
    %4 = vector.shape_cast %3 : vector<128xf32> to vector<1x128xf32>
    %5 = arith.mulf %2, %2 : vector<8x128xf32>
    %cst_4 = arith.constant dense<0.000000e+00> : vector<128xf32>
    %6 = vector.multi_reduction <add>, %5, %cst_4 [0] : vector<8x128xf32> to vector<128xf32>
    %7 = vector.shape_cast %6 : vector<128xf32> to vector<1x128xf32>
    %cst_5 = arith.constant 1.250000e-01 : f32
    %8 = vector.broadcast %cst_5 : f32 to vector<1x128xf32>
    %9 = arith.mulf %4, %8 : vector<1x128xf32>
    %cst_6 = arith.constant 1.250000e-01 : f32
    %10 = vector.broadcast %cst_6 : f32 to vector<1x128xf32>
    %11 = arith.mulf %7, %10 : vector<1x128xf32>
    %12 = arith.mulf %9, %9 : vector<1x128xf32>
    %13 = arith.subf %11, %12 : vector<1x128xf32>
    %cst_7 = arith.constant 0.000000e+00 : f32
    %14 = vector.broadcast %cst_7 : f32 to vector<1x128xf32>
    %15 = arith.maximumf %13, %14 : vector<1x128xf32>
    %cst_8 = arith.constant 9.99999974E-6 : f32
    %16 = vector.broadcast %cst_8 : f32 to vector<1x128xf32>
    %17 = arith.addf %15, %16 : vector<1x128xf32>
    %18 = math.rsqrt %17 : vector<1x128xf32>
    %c0_9 = arith.constant 0 : index
    %c0_10 = arith.constant 0 : index
    %19 = vector.load %arg4[%c0_9, %c0_10] : memref<2x128xf32, #tpu.memory_space<vmem>>, vector<1x128xf32>
    %c1 = arith.constant 1 : index
    %c0_11 = arith.constant 0 : index
    %20 = vector.load %arg4[%c1, %c0_11] : memref<2x128xf32, #tpu.memory_space<vmem>>, vector<1x128xf32>
    %21 = arith.mulf %19, %18 : vector<1x128xf32>
    %22 = arith.mulf %9, %21 : vector<1x128xf32>
    %23 = arith.subf %20, %22 : vector<1x128xf32>
    %24 = vector.broadcast %21 : vector<1x128xf32> to vector<8x128xf32>
    %25 = arith.mulf %2, %24 : vector<8x128xf32>
    %26 = vector.broadcast %23 : vector<1x128xf32> to vector<8x128xf32>
    %27 = arith.addf %25, %26 : vector<8x128xf32>
    %cst_12 = arith.constant 0.000000e+00 : f32
    %28 = vector.broadcast %cst_12 : f32 to vector<8x128xf32>
    %29 = arith.maximumf %27, %28 : vector<8x128xf32>
    %c0_13 = arith.constant 0 : index
    %c0_14 = arith.constant 0 : index
    %30 = vector.load %arg5[%c0_13, %c0_14] : memref<8x128xf32, #tpu.memory_space<vmem>>, vector<8x128xf32>
    tpu.vector_store %arg5[%c0_13, %c0_14], %29 {strides = array<i32>} : memref<8x128xf32, #tpu.memory_space<vmem>>, vector<8x128xf32>,
    return
  }
  func.func @transform_0(%arg0: i32, %arg1: i32) -> (i32, i32) {
    %c0_i32 = arith.constant 0 : i32
    %c0_i32_0 = arith.constant 0 : i32
    return %c0_i32, %arg1 : i32, i32
  }
  func.func @transform_1(%arg0: i32, %arg1: i32) -> (i32, i32) {
    %c0_i32 = arith.constant 0 : i32
    return %arg1, %arg0 : i32, i32
  }
  func.func @transform_2(%arg0: i32, %arg1: i32) -> (i32, i32) {
    %c0_i32 = arith.constant 0 : i32
    %c0_i32_0 = arith.constant 0 : i32
    return %c0_i32, %arg0 : i32, i32
  }
  func.func @transform_3(%arg0: i32, %arg1: i32) -> (i32, i32) {
    %c0_i32 = arith.constant 0 : i32
    %c0_i32_0 = arith.constant 0 : i32
    return %c0_i32, %arg0 : i32, i32
  }
}

</mosaic_0001>

<llo_original>
// kernel: tpu_custom_call.1
$region0: #{tpu_custom_call.1}
  #allocation0 [shape = 'u32[]', space=smem, size = 0x4, offset = 0x4, fixed_abs, tag = 'smem constant byte address 0x4 - core index']
  #allocation1 [shape = 'u32[144,128]{1,0:T(1,128)}', space=vmem, size = 0x12000, scoped, tag = 'internal scratch']
  %s0 = inlined_call_operand.hbm [shape: f32[8,128], index: 0, kind: input, shape index: {}]
  %s1 = inlined_call_operand.hbm [shape: f32[128,128], index: 1, kind: input, shape index: {}]
  %s2 = inlined_call_operand.vmem [shape: f32[2,128], index: 2, kind: input, shape index: {}]
  %s3 = inlined_call_operand.hbm [shape: f32[8,128], index: 3, kind: output, shape index: {}]
  %s4 = sld [smem:[#allocation0]]
  $region30: #{tpu_custom_call.1} parent=0
    _
  %s6 = ssub.s32 1, %s4
  %s7 = scalar_select 0, %s6, %s4
  $region1: #{tpu_custom_call.1} parent=0
    #allocation2 [shape = 'u8[4096]{0}', space=vmem, size = 0x1000, scoped, tag = 'input window, operand 0, single buffered']
    #allocation3 [shape = 's32[1]{0}', space=sflag, size = 0x4, scoped, tag = 'scoped memory for tpu_custom_call.1']
    #allocation4 [shape = 's32[1]{0}', space=sflag, size = 0x4, scoped, tag = 'scoped memory for tpu_custom_call.1']
    #allocation5 [shape = 'u8[65536]{0}', space=vmem, size = 0x10000, scoped, tag = 'input window, operand 1, single buffered']
    #allocation6 [shape = 's32[1]{0}', space=sflag, size = 0x4, scoped, tag = 'scoped memory for tpu_custom_call.1']
    #allocation7 [shape = 'u8[4096]{0}', space=vmem, size = 0x1000, scoped, tag = 'output window, operand 0, single buffered']
    %8 = vsyncpa [#allocation3], 0
    %9 = vsyncpa [#allocation6], 0
    %10 = vsyncpa [#allocation4], 0
    // Predicated region
    $region2: #{tpu_custom_call.1} parent=1 // pred_check
      _
    $region3: #{tpu_custom_call.1} parent=1 // pred_check_branch
      %12 = sbr.rel (0) target = $region5
    $region4: #{tpu_custom_call.1} parent=1 // pred_region
      %s14 = ssub.s32 128, 128
      %15 = vsyncadd [#allocation3], %s14
      %s17 = sshll.u32 [#allocation2], 4
      %s18 = int_to_ptr.vmem [resolvable:$true] %s17
      %20 = dma.hbm_to_vmem [thread:$0]  %s0, 128, %s18, [#allocation3]
    $region5: #{tpu_custom_call.1} parent=1 // pred_fallthru
      _
    // Predicated region
    $region6: #{tpu_custom_call.1} parent=1 // pred_check
      _
    $region7: #{tpu_custom_call.1} parent=1 // pred_check_branch
      %22 = sbr.rel (0) target = $region9
    $region8: #{tpu_custom_call.1} parent=1 // pred_region
      %s24 = ssub.s32 2048, 2048
      %25 = vsyncadd [#allocation6], %s24
      %s26 = sshll.u32 [#allocation5], 4
      %s27 = int_to_ptr.vmem [resolvable:$true] %s26
      %32 = dma.hbm_to_vmem [thread:$0]  %s1, 2048, %s27, [#allocation6], 128, 128, 8
    $region9: #{tpu_custom_call.1} parent=1 // pred_fallthru
      _
    // Predicated region
    $region10: #{tpu_custom_call.1} parent=1 // pred_check
      _
    $region11: #{tpu_custom_call.1} parent=1 // pred_check_branch
      %34 = sbr.rel (0) target = $region13
    $region12: #{tpu_custom_call.1} parent=1 // pred_region
      _
    $region13: #{tpu_custom_call.1} parent=1 // pred_fallthru
      _
    // Predicated region
    $region14: #{tpu_custom_call.1} parent=1 // pred_check
      _
    $region15: #{tpu_custom_call.1} parent=1 // pred_check_branch
      %36 = sbr.rel (0) target = $region17
    $region16: #{tpu_custom_call.1} parent=1 // pred_region
      %37 = dma.done [#allocation3], 128
    $region17: #{tpu_custom_call.1} parent=1 // pred_fallthru
      _
    // Predicated region
    $region18: #{tpu_custom_call.1} parent=1 // pred_check
      _
    $region19: #{tpu_custom_call.1} parent=1 // pred_check_branch
      %39 = sbr.rel (0) target = $region21
    $region20: #{tpu_custom_call.1} parent=1 // pred_region
      %40 = dma.done [#allocation6], 2048
    $region21: #{tpu_custom_call.1} parent=1 // pred_fallthru
      _
    %v41 = vld [vmem:[#allocation2] sm:$0xff]
    %v42 = vld [vmem:[#allocation5] sm:$0xff]
    %v43 = vld [vmem:[#allocation5 + $0x8] sm:$0xff]
    %v44 = vld [vmem:[#allocation5 + $0x10] sm:$0xff]
    %v45 = vld [vmem:[#allocation5 + $0x18] sm:$0xff]
    %v46 = vld [vmem:[#allocation5 + $0x20] sm:$0xff]
    %v47 = vld [vmem:[#allocation5 + $0x28] sm:$0xff]
    %v48 = vld [vmem:[#allocation5 + $0x30] sm:$0xff]
    %v49 = vld [vmem:[#allocation5 + $0x38] sm:$0xff]
    %v50 = vld [vmem:[#allocation5 + $0x40] sm:$0xff]
    %v51 = vld [vmem:[#allocation5 + $0x48] sm:$0xff]
    %v52 = vld [vmem:[#allocation5 + $0x50] sm:$0xff]
    %v53 = vld [vmem:[#allocation5 + $0x58] sm:$0xff]
    %v54 = vld [vmem:[#allocation5 + $0x60] sm:$0xff]
    %v55 = vld [vmem:[#allocation5 + $0x68] sm:$0xff]
    %v56 = vld [vmem:[#allocation5 + $0x70] sm:$0xff]
    %v57 = vld [vmem:[#allocation5 + $0x78] sm:$0xff]
    %58 = vmatprep.subr.mxu0 0.0
    %59 = vmatpush1.msra.mxu0 %v42
    %60 = vmatprep.subr.mxu0 0.0
    %61 = vmatpush1.msra.mxu0 %v43
    %62 = vmatprep.subr.mxu0 0.0
    %63 = vmatpush1.msra.mxu0 %v44
    %64 = vmatprep.subr.mxu0 0.0
    %65 = vmatpush1.msra.mxu0 %v45
    %66 = vmatprep.subr.mxu0 0.0
    %67 = vmatpush1.msra.mxu0 %v46
    %68 = vmatprep.subr.mxu0 0.0
    %69 = vmatpush1.msra.mxu0 %v47
    %70 = vmatprep.subr.mxu0 0.0
    %71 = vmatpush1.msra.mxu0 %v48
    %72 = vmatprep.subr.mxu0 0.0
    %73 = vmatpush1.msra.mxu0 %v49
    %74 = vmatprep.subr.mxu0 0.0
    %75 = vmatpush1.msra.mxu0 %v50
    %76 = vmatprep.subr.mxu0 0.0
    %77 = vmatpush1.msra.mxu0 %v51
    %78 = vmatprep.subr.mxu0 0.0
    %79 = vmatpush1.msra.mxu0 %v52
    %80 = vmatprep.subr.mxu0 0.0
    %81 = vmatpush1.msra.mxu0 %v53
    %82 = vmatprep.subr.mxu0 0.0
    %83 = vmatpush1.msra.mxu0 %v54
    %84 = vmatprep.subr.mxu0 0.0
    %85 = vmatpush1.msra.mxu0 %v55
    %86 = vmatprep.subr.mxu0 0.0
    %87 = vmatpush1.msra.mxu0 %v56
    %88 = vmatprep.subr.mxu0 0.0
    %89 = vmatpush1.msra.mxu0 %v57
    %90 = vmatprep.subr.mxu0 0.0
    %91 = vmatpush1.msra.mxu0 0.0
    %92 = vmatprep.subr.mxu0 0.0
    %93 = vmatpush1.msra.mxu0 0.0
    %94 = vmatprep.subr.mxu0 0.0
    %95 = vmatpush1.msra.mxu0 0.0
    %96 = vmatprep.subr.mxu0 0.0
    %97 = vmatpush1.msra.mxu0 0.0
    %98 = vmatprep.subr.mxu0 0.0
    %99 = vmatpush1.msra.mxu0 0.0
    %100 = vmatprep.subr.mxu0 0.0
    %101 = vmatpush1.msra.mxu0 0.0
    %102 = vmatprep.subr.mxu0 0.0
    %103 = vmatpush1.msra.mxu0 0.0
    %104 = vmatprep.subr.mxu0 0.0
    %105 = vmatpush1.msra.mxu0 0.0
    %106 = vmatprep.subr.mxu0 0.0
    %107 = vmatpush1.msra.mxu0 0.0
    %108 = vmatprep.subr.mxu0 0.0
    %109 = vmatpush1.msra.mxu0 0.0
    %110 = vmatprep.subr.mxu0 0.0
    %111 = vmatpush1.msra.mxu0 0.0
    %112 = vmatprep.subr.mxu0 0.0
    %113 = vmatpush1.msra.mxu0 0.0
    %114 = vmatprep.subr.mxu0 0.0
    %115 = vmatpush1.msra.mxu0 0.0
    %116 = vmatprep.subr.mxu0 0.0
    %117 = vmatpush1.msra.mxu0 0.0
    %118 = vmatprep.subr.mxu0 0.0
    %119 = vmatpush1.msra.mxu0 0.0
    %120 = vmatprep.subr.mxu0 0.0
    %121 = vmatpush1.msra.mxu0 0.0
    %122 = vmatprep.mubr.f32.mxu0 0.0
    %123 = vmatmul.mubr.f32.gmra.mrb[0].mxu0 %v41
    %v124 = vpop.f32.mrb[0].mxu0
    %v125 = vadd.f32 0.0, %v124
    %v126 = vpop.f32.mrb[0].mxu0
    %127 = vdwg.mxu0
    %v128 = vrot.slane %v125, 4
    %v129 = vadd.f32 %v125, %v128
    %v130 = vrot.slane %v129, 2
    %v131 = vadd.f32 %v129, %v130
    %v132 = vrot.slane %v131, 1
    %v133 = vadd.f32 %v131, %v132
    %v134 = vmul.f32 %v125, %v125
    %v135 = vrot.slane %v134, 4
    %v136 = vadd.f32 %v134, %v135
    %v137 = vrot.slane %v136, 2
    %v138 = vadd.f32 %v136, %v137
    %v139 = vrot.slane %v138, 1
    %v140 = vadd.f32 %v138, %v139
    %v141 = vmul.f32 %v133, 0.125
    %v142 = vmul.f32 %v140, 0.125
    %v143 = vmul.f32 %v141, %v141
    %v144 = vsub.f32 %v142, %v143
    %v145 = vmax.f32 %v144, 0.0
    %v146 = vadd.f32 %v145, 1e-05
    %v147 = vrsqrt.pop %v146
    %v148 = vld [vmem:[%s2] sm:$0x1]
    %v149 = vld [vmem:[%s2 + $0x1] sm:$0x1]
    %v150 = vmul.f32 %v148, %v147
    %v151 = vmul.f32 %v141, %v150
    %v152 = vsub.f32 %v149, %v151
    %v153 = vlaneseq
    %v154 = vshrl.u32 %v153, 7
    %v155 = vsub.s32 0, %v154
    %v156 = vrot.slane %v150, %v155
    %v157 = vmul.f32 %v125, %v156
    %v158 = vlaneseq
    %v159 = vshrl.u32 %v158, 7
    %v160 = vsub.s32 0, %v159
    %v161 = vrot.slane %v152, %v160
    %v162 = vadd.f32 %v157, %v161
    %v163 = vmax.f32 %v162, 0.0
    %164 = vst [vmem:[#allocation7] sm:$0xff] %v163
    // Predicated region
    $region22: #{tpu_custom_call.1} parent=1 // pred_check
      _
    $region23: #{tpu_custom_call.1} parent=1 // pred_check_branch
      %166 = sbr.rel (0) target = $region25
    $region24: #{tpu_custom_call.1} parent=1 // pred_region
      %s168 = ssub.s32 128, 128
      %169 = vsyncadd [#allocation4], %s168
      %s171 = sshll.u32 [#allocation7], 4
      %s172 = int_to_ptr.vmem [resolvable:$true] %s171
      %174 = dma.vmem_to_hbm [thread:$0]  %s172, 128, %s3, [#allocation4]
    $region25: #{tpu_custom_call.1} parent=1 // pred_fallthru
      _
    // Predicated region
    $region26: #{tpu_custom_call.1} parent=1 // pred_check
      _
    $region27: #{tpu_custom_call.1} parent=1 // pred_check_branch
      %176 = sbr.rel (0) target = $region29
    $region28: #{tpu_custom_call.1} parent=1 // pred_region
      %177 = dma.done [#allocation4], 128
    $region29: #{tpu_custom_call.1} parent=1 // pred_fallthru
      _
    %178 = vsyncpa [#allocation3], 1
    %179 = vsyncpa [#allocation6], 1
    %180 = vsyncpa [#allocation4], 1

</llo_original>
